<compile_context>
chip_gen: v6e
topology: v6e:2x2x1
jax: 0.10.0
libtpu: 0.0.40
codegen_flags: <defaults>
</compile_context>

<pallas_src>
import jax
import jax.numpy as jnp
from jax import lax
from jax.experimental import pallas as pl
from jax.experimental.pallas import tpu as pltpu


def up_double_conv_kernel(x2_ref, x1_ref, w1_ref, s1_ref, b1_ref,
                          w2_ref, s2_ref, b2_ref, o_ref):
    """One batch element per grid step. Block shapes:
       x2_ref : (1, Cin, L)      padded skip input   (NCL, L on lanes)
       x1_ref : (1, Cin, L)      upsampled input     (NCL)
       w1_ref : (Cout, 3*2*Cin)  conv1 weight, taps concatenated along K
       s1_ref, b1_ref : (Cout, 1) folded BN1 scale / shift (incl. conv1 bias)
       w2_ref : (Cout, 3*Cout)   conv2 weight, taps concatenated along K
       s2_ref, b2_ref : (Cout, 1) folded BN2 scale / shift (incl. conv2 bias)
       o_ref  : (1, Cout, L)
    """
    # torch.cat([x2, x1], dim=1) -> channel (sublane) concat in registers.
    xc = jnp.concatenate([x2_ref[0], x1_ref[0]], axis=0)        # (2*Cin, L)
    L = xc.shape[-1]

    def im2col3(a):
        # (C, L) -> (3*C, L): row blocks are a[:, l-1], a[:, l], a[:, l+1]
        # with zero padding at the edges (conv pad=1 halo built in registers).
        z = jnp.zeros((a.shape[0], 1), a.dtype)
        left = jnp.concatenate([z, a[:, : L - 1]], axis=1)      # a[:, l-1]
        right = jnp.concatenate([a[:, 1:], z], axis=1)          # a[:, l+1]
        return jnp.concatenate([left, a, right], axis=0)

    # ---- conv1 as a single K = 3*2*Cin matmul, + folded BN1 + ReLU ----
    h = jnp.dot(w1_ref[...], im2col3(xc), preferred_element_type=jnp.float32)
    h = jnp.maximum(h * s1_ref[...] + b1_ref[...], 0.0)         # (Cout, L)

    # ---- conv2 as a single K = 3*Cout matmul, + folded BN2 + ReLU ----
    y = jnp.dot(w2_ref[...], im2col3(h), preferred_element_type=jnp.float32)
    y = jnp.maximum(y * s2_ref[...] + b2_ref[...], 0.0)         # (Cout, L)

    o_ref[0] = y.astype(o_ref.dtype)


def fold_bn(conv_bias, gamma, beta, mean, var, eps=1e-5):
    scale = gamma / jnp.sqrt(var + eps)
    shift = beta + (conv_bias - mean) * scale
    return scale, shift


def up_pallas(x1, x2, params):
    """x1: (N, in_ch, L1), x2: (N, in_ch, ~2*L1), NCL (PyTorch) layout.
       Returns (N, out_ch, 2*L1)."""
    (w_up, b_up,
     w1, b1, g1, be1, m1, v1,
     w2, b2, g2, be2, m2, v2) = params

    N, Cin, L1 = x1.shape
    Cout = w1.shape[0]
    L = 2 * L1

    # --- ConvTranspose1d(in_ch, in_ch, k=2, stride=2): tiny, done in XLA ---
    # out[n, o, 2l+k] = b[o] + sum_i x1[n, i, l] * w_up[i, o, k]
    u = jnp.einsum("nil,iok->nolk", x1, w_up) + b_up[None, :, None, None]
    x1_up = u.reshape(N, Cin, L)          # contiguous (l, k) merge == interleave

    # --- F.pad(x2, (diffX//2, int(diffX/2))) --- (static shapes)
    diffX = L - x2.shape[2]
    x2p = jnp.pad(x2, ((0, 0), (0, 0), (diffX // 2, int(diffX / 2))))

    # --- fold BN (eval mode) + conv bias into per-channel scale / shift ---
    s1, sh1 = fold_bn(b1, g1, be1, m1, v1)
    s2, sh2 = fold_bn(b2, g2, be2, m2, v2)

    # PyTorch conv weights (Cout, C, 3) -> (Cout, 3*C), tap-major column blocks.
    w1f = jnp.concatenate([w1[:, :, k] for k in range(3)], axis=1)
    w2f = jnp.concatenate([w2[:, :, k] for k in range(3)], axis=1)

    def full_spec(a):                      # whole-array block, constant index
        zeros = (0,) * a.ndim
        return pl.BlockSpec(a.shape, lambda n, _z=zeros: _z)

    x_spec = pl.BlockSpec((1, Cin, L), lambda n: (n, 0, 0))
    o_spec = pl.BlockSpec((1, Cout, L), lambda n: (n, 0, 0))

    s1c = s1.reshape(Cout, 1).astype(jnp.float32)
    b1c = sh1.reshape(Cout, 1).astype(jnp.float32)
    s2c = s2.reshape(Cout, 1).astype(jnp.float32)
    b2c = sh2.reshape(Cout, 1).astype(jnp.float32)

    out = pl.pallas_call(
        up_double_conv_kernel,
        out_shape=jax.ShapeDtypeStruct((N, Cout, L), jnp.float32),
        grid=(N,),
        in_specs=[x_spec, x_spec,
                  full_spec(w1f), full_spec(s1c), full_spec(b1c),
                  full_spec(w2f), full_spec(s2c), full_spec(b2c)],
        out_specs=o_spec,
        compiler_params=pltpu.CompilerParams(
            dimension_semantics=("parallel",),
            vmem_limit_bytes=64 * 1024 * 1024),
    )(x2p, x1_up, w1f, s1c, b1c, w2f, s2c, b2c)

    return out


# --------------------------- pure-JAX reference ---------------------------

def up_reference(x1, x2, params):
    (w_up, b_up,
     w1, b1, g1, be1, m1, v1,
     w2, b2, g2, be2, m2, v2) = params
    eps = 1e-5

    # ConvTranspose1d(k=2, stride=2) == lhs-dilated conv with flipped kernel.
    w_t = jnp.transpose(jnp.flip(w_up, axis=2), (1, 0, 2))       # (O, I, 2)
    x1_up = lax.conv_general_dilated(
        x1, w_t, window_strides=(1,), padding=[(1, 1)], lhs_dilation=(2,),
        dimension_numbers=("NCH", "OIH", "NCH")) + b_up[None, :, None]

    diffX = x1_up.shape[2] - x2.shape[2]
    x2p = jnp.pad(x2, ((0, 0), (0, 0), (diffX // 2, int(diffX / 2))))
    x = jnp.concatenate([x2p, x1_up], axis=1)

    def conv_bn_relu(x, w, b, g, be, m, v):
        y = lax.conv_general_dilated(
            x, w, window_strides=(1,), padding=[(1, 1)],
            dimension_numbers=("NCH", "OIH", "NCH"))
        y = y + b[None, :, None]
        y = (y - m[None, :, None]) / jnp.sqrt(v[None, :, None] + eps)
        y = y * g[None, :, None] + be[None, :, None]
        return jnp.maximum(y, 0.0)

    h = conv_bn_relu(x, w1, b1, g1, be1, m1, v1)
    return conv_bn_relu(h, w2, b2, g2, be2, m2, v2)


def make_params(key, in_ch, out_ch):
    ks = jax.random.split(key, 14)
    ct = 2 * in_ch
    w_up = 0.2 * jax.random.normal(ks[0], (in_ch, in_ch, 2), jnp.float32)
    b_up = 0.1 * jax.random.normal(ks[1], (in_ch,), jnp.float32)
    w1 = 0.1 * jax.random.normal(ks[2], (out_ch, ct, 3), jnp.float32)
    b1 = 0.1 * jax.random.normal(ks[3], (out_ch,), jnp.float32)
    g1 = 1.0 + 0.1 * jax.random.normal(ks[4], (out_ch,), jnp.float32)
    be1 = 0.1 * jax.random.normal(ks[5], (out_ch,), jnp.float32)
    m1 = 0.1 * jax.random.normal(ks[6], (out_ch,), jnp.float32)
    v1 = 1.0 + 0.1 * jax.random.uniform(ks[7], (out_ch,), jnp.float32)
    w2 = 0.1 * jax.random.normal(ks[8], (out_ch, out_ch, 3), jnp.float32)
    b2 = 0.1 * jax.random.normal(ks[9], (out_ch,), jnp.float32)
    g2 = 1.0 + 0.1 * jax.random.normal(ks[10], (out_ch,), jnp.float32)
    be2 = 0.1 * jax.random.normal(ks[11], (out_ch,), jnp.float32)
    m2 = 0.1 * jax.random.normal(ks[12], (out_ch,), jnp.float32)
    v2 = 1.0 + 0.1 * jax.random.uniform(ks[13], (out_ch,), jnp.float32)
    return (w_up, b_up, w1, b1, g1, be1, m1, v1, w2, b2, g2, be2, m2, v2)


if __name__ == "__main__":
    key = jax.random.PRNGKey(0)
    k1, k2, kp = jax.random.split(key, 3)

    N, IN_CH, OUT_CH, L1 = 2, 4, 8, 8          # x1: (2,4,8), x2: (2,4,16)
    x1 = jax.random.normal(k1, (N, IN_CH, L1), jnp.float32)
    x2 = jax.random.normal(k2, (N, IN_CH, 2 * L1), jnp.float32)
    params = make_params(kp, IN_CH, OUT_CH)

    out = jax.block_until_ready(up_pallas(x1, x2, params))
    ref = up_reference(x1, x2, params)

    assert out.shape == (N, OUT_CH, 2 * L1)
    max_err = float(jnp.max(jnp.abs(out - ref)))
    assert jnp.allclose(out, ref, atol=1e-4, rtol=1e-4), max_err

    print("KERNEL_OK")
</pallas_src>

<mosaic_0001>
module attributes {stable_mosaic.version = 11 : i64} {
  func.func @up_double_conv_kernel(%arg0: i32, %arg1: memref<1x4x16xf32, #tpu.memory_space<vmem>>, %arg2: memref<1x4x16xf32, #tpu.memory_space<vmem>>, %arg3: memref<8x24xf32, #tpu.memory_space<vmem>>, %arg4: memref<8x1xf32, #tpu.memory_space<vmem>>, %arg5: memref<8x1xf32, #tpu.memory_space<vmem>>, %arg6: memref<8x24xf32, #tpu.memory_space<vmem>>, %arg7: memref<8x1xf32, #tpu.memory_space<vmem>>, %arg8: memref<8x1xf32, #tpu.memory_space<vmem>>, %arg9: memref<1x8x16xf32, #tpu.memory_space<vmem>>) attributes {dimension_semantics = [#tpu.dimension_semantics<parallel>], iteration_bounds = array<i64: 2>, scalar_prefetch = 0 : i64, scratch_operands = 0 : i64, tpu.core_type = #tpu.core_type<tc>, window_params = [{transform_indices = @transform_0, window_bounds = array<i64: 1, 4, 16>}, {transform_indices = @transform_1, window_bounds = array<i64: 1, 4, 16>}, {pipeline_mode = #tpu.pipeline_mode<synchronous>, transform_indices = @transform_2, window_bounds = array<i64: 8, 24>}, {pipeline_mode = #tpu.pipeline_mode<synchronous>, transform_indices = @transform_3, window_bounds = array<i64: 8, 1>}, {pipeline_mode = #tpu.pipeline_mode<synchronous>, transform_indices = @transform_4, window_bounds = array<i64: 8, 1>}, {pipeline_mode = #tpu.pipeline_mode<synchronous>, transform_indices = @transform_5, window_bounds = array<i64: 8, 24>}, {pipeline_mode = #tpu.pipeline_mode<synchronous>, transform_indices = @transform_6, window_bounds = array<i64: 8, 1>}, {pipeline_mode = #tpu.pipeline_mode<synchronous>, transform_indices = @transform_7, window_bounds = array<i64: 8, 1>}, {transform_indices = @transform_8, window_bounds = array<i64: 1, 8, 16>}]} {
    %c0 = arith.constant 0 : index
    %c0_0 = arith.constant 0 : index
    %c0_1 = arith.constant 0 : index
    %0 = vector.load %arg1[%c0, %c0_0, %c0_1] : memref<1x4x16xf32, #tpu.memory_space<vmem>>, vector<1x4x16xf32>
    %1 = vector.shape_cast %0 : vector<1x4x16xf32> to vector<4x16xf32>
    %c0_2 = arith.constant 0 : index
    %c0_3 = arith.constant 0 : index
    %c0_4 = arith.constant 0 : index
    %2 = vector.load %arg2[%c0_2, %c0_3, %c0_4] : memref<1x4x16xf32, #tpu.memory_space<vmem>>, vector<1x4x16xf32>
    %3 = vector.shape_cast %2 : vector<1x4x16xf32> to vector<4x16xf32>
    %4 = tpu.concatenate %1, %3 in 0 : vector<4x16xf32>, vector<4x16xf32> -> vector<8x16xf32>
    %c0_5 = arith.constant 0 : index
    %c0_6 = arith.constant 0 : index
    %5 = vector.load %arg3[%c0_5, %c0_6] : memref<8x24xf32, #tpu.memory_space<vmem>>, vector<8x24xf32>
    %cst = arith.constant 0.000000e+00 : f32
    %6 = vector.broadcast %cst : f32 to vector<8x1xf32>
    %7 = vector.extract_strided_slice %4 {offsets = [0, 0], sizes = [8, 15], strides = [1, 1]} : vector<8x16xf32> to vector<8x15xf32>
    %8 = tpu.concatenate %6, %7 in 1 : vector<8x1xf32>, vector<8x15xf32> -> vector<8x16xf32>
    %9 = vector.extract_strided_slice %4 {offsets = [0, 1], sizes = [8, 15], strides = [1, 1]} : vector<8x16xf32> to vector<8x15xf32>
    %10 = tpu.concatenate %9, %6 in 1 : vector<8x15xf32>, vector<8x1xf32> -> vector<8x16xf32>
    %11 = tpu.concatenate %8, %4, %10 in 0 : vector<8x16xf32>, vector<8x16xf32>, vector<8x16xf32> -> vector<24x16xf32>
    %cst_7 = arith.constant dense<0.000000e+00> : vector<8x16xf32>
    %12 = tpu.matmul %5, %11, %cst_7 {dimension_numbers = #tpu.dot_dimension_numbers<[1], [0], [0], [1], [0, 0, 1, 1], [], []>} : vector<8x24xf32>, vector<24x16xf32>, vector<8x16xf32> -> vector<8x16xf32>
    %c0_8 = arith.constant 0 : index
    %c0_9 = arith.constant 0 : index
    %13 = vector.load %arg4[%c0_8, %c0_9] : memref<8x1xf32, #tpu.memory_space<vmem>>, vector<8x1xf32>
    %14 = vector.broadcast %13 : vector<8x1xf32> to vector<8x16xf32>
    %15 = arith.mulf %12, %14 : vector<8x16xf32>
    %c0_10 = arith.constant 0 : index
    %c0_11 = arith.constant 0 : index
    %16 = vector.load %arg5[%c0_10, %c0_11] : memref<8x1xf32, #tpu.memory_space<vmem>>, vector<8x1xf32>
    %17 = vector.broadcast %16 : vector<8x1xf32> to vector<8x16xf32>
    %18 = arith.addf %15, %17 : vector<8x16xf32>
    %cst_12 = arith.constant 0.000000e+00 : f32
    %19 = vector.broadcast %cst_12 : f32 to vector<8x16xf32>
    %20 = arith.maximumf %18, %19 : vector<8x16xf32>
    %c0_13 = arith.constant 0 : index
    %c0_14 = arith.constant 0 : index
    %21 = vector.load %arg6[%c0_13, %c0_14] : memref<8x24xf32, #tpu.memory_space<vmem>>, vector<8x24xf32>
    %cst_15 = arith.constant 0.000000e+00 : f32
    %22 = vector.broadcast %cst_15 : f32 to vector<8x1xf32>
    %23 = vector.extract_strided_slice %20 {offsets = [0, 0], sizes = [8, 15], strides = [1, 1]} : vector<8x16xf32> to vector<8x15xf32>
    %24 = tpu.concatenate %22, %23 in 1 : vector<8x1xf32>, vector<8x15xf32> -> vector<8x16xf32>
    %25 = vector.extract_strided_slice %20 {offsets = [0, 1], sizes = [8, 15], strides = [1, 1]} : vector<8x16xf32> to vector<8x15xf32>
    %26 = tpu.concatenate %25, %22 in 1 : vector<8x15xf32>, vector<8x1xf32> -> vector<8x16xf32>
    %27 = tpu.concatenate %24, %20, %26 in 0 : vector<8x16xf32>, vector<8x16xf32>, vector<8x16xf32> -> vector<24x16xf32>
    %cst_16 = arith.constant dense<0.000000e+00> : vector<8x16xf32>
    %28 = tpu.matmul %21, %27, %cst_16 {dimension_numbers = #tpu.dot_dimension_numbers<[1], [0], [0], [1], [0, 0, 1, 1], [], []>} : vector<8x24xf32>, vector<24x16xf32>, vector<8x16xf32> -> vector<8x16xf32>
    %c0_17 = arith.constant 0 : index
    %c0_18 = arith.constant 0 : index
    %29 = vector.load %arg7[%c0_17, %c0_18] : memref<8x1xf32, #tpu.memory_space<vmem>>, vector<8x1xf32>
    %30 = vector.broadcast %29 : vector<8x1xf32> to vector<8x16xf32>
    %31 = arith.mulf %28, %30 : vector<8x16xf32>
    %c0_19 = arith.constant 0 : index
    %c0_20 = arith.constant 0 : index
    %32 = vector.load %arg8[%c0_19, %c0_20] : memref<8x1xf32, #tpu.memory_space<vmem>>, vector<8x1xf32>
    %33 = vector.broadcast %32 : vector<8x1xf32> to vector<8x16xf32>
    %34 = arith.addf %31, %33 : vector<8x16xf32>
    %cst_21 = arith.constant 0.000000e+00 : f32
    %35 = vector.broadcast %cst_21 : f32 to vector<8x16xf32>
    %36 = arith.maximumf %34, %35 : vector<8x16xf32>
    %c0_22 = arith.constant 0 : index
    %c0_23 = arith.constant 0 : index
    %c0_24 = arith.constant 0 : index
    %37 = vector.load %arg9[%c0_22, %c0_23, %c0_24] : memref<1x8x16xf32, #tpu.memory_space<vmem>>, vector<1x8x16xf32>
    %38 = vector.shape_cast %37 : vector<1x8x16xf32> to vector<8x16xf32>
    %39 = vector.shape_cast %36 : vector<8x16xf32> to vector<1x8x16xf32>
    tpu.vector_store %arg9[%c0_22, %c0_23, %c0_24], %39 {strides = array<i32>} : memref<1x8x16xf32, #tpu.memory_space<vmem>>, vector<1x8x16xf32>,
    return
  }
  func.func @transform_0(%arg0: i32) -> (i32, i32, i32) {
    %c0_i32 = arith.constant 0 : i32
    %c0_i32_0 = arith.constant 0 : i32
    %c0_i32_1 = arith.constant 0 : i32
    return %arg0, %c0_i32, %c0_i32_0 : i32, i32, i32
  }
  func.func @transform_1(%arg0: i32) -> (i32, i32, i32) {
    %c0_i32 = arith.constant 0 : i32
    %c0_i32_0 = arith.constant 0 : i32
    %c0_i32_1 = arith.constant 0 : i32
    return %arg0, %c0_i32, %c0_i32_0 : i32, i32, i32
  }
  func.func @transform_2(%arg0: i32) -> (i32, i32) {
    %c0_i32 = arith.constant 0 : i32
    %c0_i32_0 = arith.constant 0 : i32
    %c0_i32_1 = arith.constant 0 : i32
    return %c0_i32, %c0_i32_0 : i32, i32
  }
  func.func @transform_3(%arg0: i32) -> (i32, i32) {
    %c0_i32 = arith.constant 0 : i32
    %c0_i32_0 = arith.constant 0 : i32
    %c0_i32_1 = arith.constant 0 : i32
    return %c0_i32, %c0_i32_0 : i32, i32
  }
  func.func @transform_4(%arg0: i32) -> (i32, i32) {
    %c0_i32 = arith.constant 0 : i32
    %c0_i32_0 = arith.constant 0 : i32
    %c0_i32_1 = arith.constant 0 : i32
    return %c0_i32, %c0_i32_0 : i32, i32
  }
  func.func @transform_5(%arg0: i32) -> (i32, i32) {
    %c0_i32 = arith.constant 0 : i32
    %c0_i32_0 = arith.constant 0 : i32
    %c0_i32_1 = arith.constant 0 : i32
    return %c0_i32, %c0_i32_0 : i32, i32
  }
  func.func @transform_6(%arg0: i32) -> (i32, i32) {
    %c0_i32 = arith.constant 0 : i32
    %c0_i32_0 = arith.constant 0 : i32
    %c0_i32_1 = arith.constant 0 : i32
    return %c0_i32, %c0_i32_0 : i32, i32
  }
  func.func @transform_7(%arg0: i32) -> (i32, i32) {
    %c0_i32 = arith.constant 0 : i32
    %c0_i32_0 = arith.constant 0 : i32
    %c0_i32_1 = arith.constant 0 : i32
    return %c0_i32, %c0_i32_0 : i32, i32
  }
  func.func @transform_8(%arg0: i32) -> (i32, i32, i32) {
    %c0_i32 = arith.constant 0 : i32
    %c0_i32_0 = arith.constant 0 : i32
    %c0_i32_1 = arith.constant 0 : i32
    return %arg0, %c0_i32, %c0_i32_0 : i32, i32, i32
  }
}

</mosaic_0001>

<llo_original>
// kernel: tpu_custom_call.1
$region0: #{tpu_custom_call.1}
  #allocation0 [shape = 'u32[]', space=smem, size = 0x4, offset = 0x4, fixed_abs, tag = 'smem constant byte address 0x4 - core index']
  #allocation1 [shape = 'u32[144,128]{1,0:T(1,128)}', space=vmem, size = 0x12000, scoped, tag = 'internal scratch']
  %s0 = inlined_call_operand.vmem [shape: f32[2,4,16], index: 0, kind: input, shape index: {}]
  %s1 = inlined_call_operand.vmem [shape: f32[2,4,16], index: 1, kind: input, shape index: {}]
  %s2 = inlined_call_operand.vmem [shape: f32[8,24], index: 2, kind: input, shape index: {}]
  %s3 = inlined_call_operand.vmem [shape: f32[8,1], index: 3, kind: input, shape index: {}]
  %s4 = inlined_call_operand.vmem [shape: f32[8,1], index: 4, kind: input, shape index: {}]
  %s5 = inlined_call_operand.vmem [shape: f32[8,24], index: 5, kind: input, shape index: {}]
  %s6 = inlined_call_operand.vmem [shape: f32[8,1], index: 6, kind: input, shape index: {}]
  %s7 = inlined_call_operand.vmem [shape: f32[8,1], index: 7, kind: input, shape index: {}]
  %s8 = inlined_call_operand.hbm [shape: f32[2,8,16], index: 8, kind: output, shape index: {}]
  %s9 = sld [smem:[#allocation0]]
  $region65: #{tpu_custom_call.1} parent=0
    _
  %s11 = ssub.s32 1, %s9
  %s12 = scalar_select 0, %s11, %s9
  $region1: #{tpu_custom_call.1} parent=0
    #allocation2 [shape = 'u8[8192]{0}', space=vmem, size = 0x2000, scoped, tag = 'output window, operand 0']
    #allocation3 [shape = 's32[2]{0}', space=sflag, size = 0x8, scoped, tag = 'scoped memory for tpu_custom_call.1']
    %13 = vsyncpa [#allocation3], 0
    %s14 = scalar_lea.sflag [#allocation3], 1
    %15 = vsyncpa %s14, 0
    loop: start=0, step=1, limit=4
    $region2: #{tpu_custom_call.1} parent=1 // loop_pre_header
      _
    $region3: #{tpu_custom_call.1} parent=1 // loop_header
      %s17 = sphi 0, %s21
      %p18 = scmp.ge.s32.totalorder %s17, 4
      %s27 = sphi 0, %s29
      %s30 = sphi 0, %s27
      %s31 = sphi 0, %s30
      %s47 = sphi 0, %s31
      %s53 = sphi 0, %s55
      %s56 = sphi 0, %s53
      %s57 = sphi 0, %s56
      %s73 = sphi 0, %s57
      %s77 = sphi 0, %s77
      %s79 = sphi 0, %s77
      %s80 = sphi 0, %s79
      %s94 = sphi 0, %s80
      %s98 = sphi 0, %s98
      %s100 = sphi 0, %s98
      %s101 = sphi 0, %s100
      %s115 = sphi 0, %s101
      %s119 = sphi 0, %s119
      %s121 = sphi 0, %s119
      %s122 = sphi 0, %s121
      %s136 = sphi 0, %s122
      %s140 = sphi 0, %s140
      %s142 = sphi 0, %s140
      %s143 = sphi 0, %s142
      %s157 = sphi 0, %s143
      %s161 = sphi 0, %s161
      %s163 = sphi 0, %s161
      %s164 = sphi 0, %s163
      %s178 = sphi 0, %s164
      %s182 = sphi 0, %s182
      %s184 = sphi 0, %s182
      %s185 = sphi 0, %s184
      %s199 = sphi 0, %s185
      %s205 = sphi 0, %s207
      %s208 = sphi 0, %s205
      %s209 = sphi 0, %s208
      %s225 = sphi 0, %s209
    $region4: #{tpu_custom_call.1} parent=1 // loop_header_branch
      %20 = sbr.rel (%p18) target = $region8
    $region5: #{tpu_custom_call.1} parent=1 // loop_body
      %s22 = ssub.s32 %s17, 1
      %s23 = ssub.s32 %s17, 2
      %s24 = sadd.s32 %s17, 1
      %s25 = ssub.s32 %s17, %s24
      %p26 = scmp.eq.s32.totalorder %s25, 0
      %s28 = sadd.s32 %s27, 1
      %s29 = scalar_select %p26, %s27, %s28
      %p32 = pneg %p26
      %p33 = scmp.eq.s32.totalorder %s17, 1
      %p34 = por %p32, %p33
      %p35 = scmp.ne.s32.totalorder %s27, %s30
      %p36 = scmp.eq.s32.totalorder %s17, 0
      %p37 = por %p35, %p36
      %p38 = scmp.ne.s32.totalorder %s27, %s30
      %p39 = scmp.eq.s32.totalorder %s22, 1
      %p40 = por %p38, %p39
      %p41 = scmp.ne.s32.totalorder %s30, %s31
      %p42 = scmp.eq.s32.totalorder %s22, 0
      %p43 = por %p41, %p42
      %p44 = scmp.ne.s32.totalorder %s30, %s31
      %p45 = scmp.eq.s32.totalorder %s23, 1
      %p46 = por %p44, %p45
      %p48 = scmp.ne.s32.totalorder %s31, %s47
      %p49 = scmp.eq.s32.totalorder %s23, 0
      %p50 = por %p48, %p49
      %s51 = ssub.s32 %s17, %s24
      %p52 = scmp.eq.s32.totalorder %s51, 0
      %s54 = sadd.s32 %s53, 1
      %s55 = scalar_select %p52, %s53, %s54
      %p58 = pneg %p52
      %p59 = scmp.eq.s32.totalorder %s17, 1
      %p60 = por %p58, %p59
      %p61 = scmp.ne.s32.totalorder %s53, %s56
      %p62 = scmp.eq.s32.totalorder %s17, 0
      %p63 = por %p61, %p62
      %p64 = scmp.ne.s32.totalorder %s53, %s56
      %p65 = scmp.eq.s32.totalorder %s22, 1
      %p66 = por %p64, %p65
      %p67 = scmp.ne.s32.totalorder %s56, %s57
      %p68 = scmp.eq.s32.totalorder %s22, 0
      %p69 = por %p67, %p68
      %p70 = scmp.ne.s32.totalorder %s56, %s57
      %p71 = scmp.eq.s32.totalorder %s23, 1
      %p72 = por %p70, %p71
      %p74 = scmp.ne.s32.totalorder %s57, %s73
      %p75 = scmp.eq.s32.totalorder %s23, 0
      %p76 = por %p74, %p75
      %s78 = sadd.s32 %s77, 1
      %p81 = scmp.eq.s32.totalorder %s17, 1
      %p82 = scmp.ne.s32.totalorder %s77, %s79
      %p83 = scmp.eq.s32.totalorder %s17, 0
      %p84 = por %p82, %p83
      %p85 = scmp.ne.s32.totalorder %s77, %s79
      %p86 = scmp.eq.s32.totalorder %s22, 1
      %p87 = por %p85, %p86
      %p88 = scmp.ne.s32.totalorder %s79, %s80
      %p89 = scmp.eq.s32.totalorder %s22, 0
      %p90 = por %p88, %p89
      %p91 = scmp.ne.s32.totalorder %s79, %s80
      %p92 = scmp.eq.s32.totalorder %s23, 1
      %p93 = por %p91, %p92
      %p95 = scmp.ne.s32.totalorder %s80, %s94
      %p96 = scmp.eq.s32.totalorder %s23, 0
      %p97 = por %p95, %p96
      %s99 = sadd.s32 %s98, 1
      %p102 = scmp.eq.s32.totalorder %s17, 1
      %p103 = scmp.ne.s32.totalorder %s98, %s100
      %p104 = scmp.eq.s32.totalorder %s17, 0
      %p105 = por %p103, %p104
      %p106 = scmp.ne.s32.totalorder %s98, %s100
      %p107 = scmp.eq.s32.totalorder %s22, 1
      %p108 = por %p106, %p107
      %p109 = scmp.ne.s32.totalorder %s100, %s101
      %p110 = scmp.eq.s32.totalorder %s22, 0
      %p111 = por %p109, %p110
      %p112 = scmp.ne.s32.totalorder %s100, %s101
      %p113 = scmp.eq.s32.totalorder %s23, 1
      %p114 = por %p112, %p113
      %p116 = scmp.ne.s32.totalorder %s101, %s115
      %p117 = scmp.eq.s32.totalorder %s23, 0
      %p118 = por %p116, %p117
      %s120 = sadd.s32 %s119, 1
      %p123 = scmp.eq.s32.totalorder %s17, 1
      %p124 = scmp.ne.s32.totalorder %s119, %s121
      %p125 = scmp.eq.s32.totalorder %s17, 0
      %p126 = por %p124, %p125
      %p127 = scmp.ne.s32.totalorder %s119, %s121
      %p128 = scmp.eq.s32.totalorder %s22, 1
      %p129 = por %p127, %p128
      %p130 = scmp.ne.s32.totalorder %s121, %s122
      %p131 = scmp.eq.s32.totalorder %s22, 0
      %p132 = por %p130, %p131
      %p133 = scmp.ne.s32.totalorder %s121, %s122
      %p134 = scmp.eq.s32.totalorder %s23, 1
      %p135 = por %p133, %p134
      %p137 = scmp.ne.s32.totalorder %s122, %s136
      %p138 = scmp.eq.s32.totalorder %s23, 0
      %p139 = por %p137, %p138
      %s141 = sadd.s32 %s140, 1
      %p144 = scmp.eq.s32.totalorder %s17, 1
      %p145 = scmp.ne.s32.totalorder %s140, %s142
      %p146 = scmp.eq.s32.totalorder %s17, 0
      %p147 = por %p145, %p146
      %p148 = scmp.ne.s32.totalorder %s140, %s142
      %p149 = scmp.eq.s32.totalorder %s22, 1
      %p150 = por %p148, %p149
      %p151 = scmp.ne.s32.totalorder %s142, %s143
      %p152 = scmp.eq.s32.totalorder %s22, 0
      %p153 = por %p151, %p152
      %p154 = scmp.ne.s32.totalorder %s142, %s143
      %p155 = scmp.eq.s32.totalorder %s23, 1
      %p156 = por %p154, %p155
      %p158 = scmp.ne.s32.totalorder %s143, %s157
      %p159 = scmp.eq.s32.totalorder %s23, 0
      %p160 = por %p158, %p159
      %s162 = sadd.s32 %s161, 1
      %p165 = scmp.eq.s32.totalorder %s17, 1
      %p166 = scmp.ne.s32.totalorder %s161, %s163
      %p167 = scmp.eq.s32.totalorder %s17, 0
      %p168 = por %p166, %p167
      %p169 = scmp.ne.s32.totalorder %s161, %s163
      %p170 = scmp.eq.s32.totalorder %s22, 1
      %p171 = por %p169, %p170
      %p172 = scmp.ne.s32.totalorder %s163, %s164
      %p173 = scmp.eq.s32.totalorder %s22, 0
      %p174 = por %p172, %p173
      %p175 = scmp.ne.s32.totalorder %s163, %s164
      %p176 = scmp.eq.s32.totalorder %s23, 1
      %p177 = por %p175, %p176
      %p179 = scmp.ne.s32.totalorder %s164, %s178
      %p180 = scmp.eq.s32.totalorder %s23, 0
      %p181 = por %p179, %p180
      %s183 = sadd.s32 %s182, 1
      %p186 = scmp.eq.s32.totalorder %s17, 1
      %p187 = scmp.ne.s32.totalorder %s182, %s184
      %p188 = scmp.eq.s32.totalorder %s17, 0
      %p189 = por %p187, %p188
      %p190 = scmp.ne.s32.totalorder %s182, %s184
      %p191 = scmp.eq.s32.totalorder %s22, 1
      %p192 = por %p190, %p191
      %p193 = scmp.ne.s32.totalorder %s184, %s185
      %p194 = scmp.eq.s32.totalorder %s22, 0
      %p195 = por %p193, %p194
      %p196 = scmp.ne.s32.totalorder %s184, %s185
      %p197 = scmp.eq.s32.totalorder %s23, 1
      %p198 = por %p196, %p197
      %p200 = scmp.ne.s32.totalorder %s185, %s199
      %p201 = scmp.eq.s32.totalorder %s23, 0
      %p202 = por %p200, %p201
      %s203 = ssub.s32 %s17, %s24
      %p204 = scmp.eq.s32.totalorder %s203, 0
      %s206 = sadd.s32 %s205, 1
      %s207 = scalar_select %p204, %s205, %s206
      %p210 = pneg %p204
      %p211 = scmp.eq.s32.totalorder %s17, 1
      %p212 = por %p210, %p211
      %p213 = scmp.ne.s32.totalorder %s205, %s208
      %p214 = scmp.eq.s32.totalorder %s17, 0
      %p215 = por %p213, %p214
      %p216 = scmp.ne.s32.totalorder %s205, %s208
      %p217 = scmp.eq.s32.totalorder %s22, 1
      %p218 = por %p216, %p217
      %p219 = scmp.ne.s32.totalorder %s208, %s209
      %p220 = scmp.eq.s32.totalorder %s22, 0
      %p221 = por %p219, %p220
      %p222 = scmp.ne.s32.totalorder %s208, %s209
      %p223 = scmp.eq.s32.totalorder %s23, 1
      %p224 = por %p222, %p223
      %p226 = scmp.ne.s32.totalorder %s209, %s225
      %p227 = scmp.eq.s32.totalorder %s23, 0
      %p228 = por %p226, %p227
      %p229 = scmp.le.s32.totalorder 1, %s17
      %p230 = scmp.lt.s32.totalorder %s17, 3
      %p231 = pnand %p229, %p230
      %p232 = pneg %p231
      // Predicated region
      $region9: #{tpu_custom_call.1} parent=5 // pred_check
        _
      $region10: #{tpu_custom_call.1} parent=5 // pred_check_branch
        %234 = sbr.rel (%p231) target = $region12
      $region11: #{tpu_custom_call.1} parent=5 // pred_region
        %s235 = ssub.s32 %s17, 1
        // Predicated region
        $region13: #{tpu_custom_call.1} parent=11 // pred_check
          %p236 = pneg %p90
        $region14: #{tpu_custom_call.1} parent=11 // pred_check_branch
          %238 = sbr.rel (%p236) target = $region16
        $region15: #{tpu_custom_call.1} parent=11 // pred_region
          _
        $region16: #{tpu_custom_call.1} parent=11 // pred_fallthru
          _
        // Predicated region
        $region17: #{tpu_custom_call.1} parent=11 // pred_check
          %p239 = pneg %p111
        $region18: #{tpu_custom_call.1} parent=11 // pred_check_branch
          %241 = sbr.rel (%p239) target = $region20
        $region19: #{tpu_custom_call.1} parent=11 // pred_region
          _
        $region20: #{tpu_custom_call.1} parent=11 // pred_fallthru
          _
        // Predicated region
        $region21: #{tpu_custom_call.1} parent=11 // pred_check
          %p242 = pneg %p132
        $region22: #{tpu_custom_call.1} parent=11 // pred_check_branch
          %244 = sbr.rel (%p242) target = $region24
        $region23: #{tpu_custom_call.1} parent=11 // pred_region
          _
        $region24: #{tpu_custom_call.1} parent=11 // pred_fallthru
          _
        // Predicated region
        $region25: #{tpu_custom_call.1} parent=11 // pred_check
          %p245 = pneg %p153
        $region26: #{tpu_custom_call.1} parent=11 // pred_check_branch
          %247 = sbr.rel (%p245) target = $region28
        $region27: #{tpu_custom_call.1} parent=11 // pred_region
          _
        $region28: #{tpu_custom_call.1} parent=11 // pred_fallthru
          _
        // Predicated region
        $region29: #{tpu_custom_call.1} parent=11 // pred_check
          %p248 = pneg %p174
        $region30: #{tpu_custom_call.1} parent=11 // pred_check_branch
          %250 = sbr.rel (%p248) target = $region32
        $region31: #{tpu_custom_call.1} parent=11 // pred_region
          _
        $region32: #{tpu_custom_call.1} parent=11 // pred_fallthru
          _
        // Predicated region
        $region33: #{tpu_custom_call.1} parent=11 // pred_check
          %p251 = pneg %p195
        $region34: #{tpu_custom_call.1} parent=11 // pred_check_branch
          %253 = sbr.rel (%p251) target = $region36
        $region35: #{tpu_custom_call.1} parent=11 // pred_region
          _
        $region36: #{tpu_custom_call.1} parent=11 // pred_fallthru
          _
      $region12: #{tpu_custom_call.1} parent=5 // pred_fallthru
        _
      %p254 = scmp.lt.s32.totalorder %s17, 2
      // Predicated region
      $region37: #{tpu_custom_call.1} parent=5 // pred_check
        %p255 = pneg %p254
      $region38: #{tpu_custom_call.1} parent=5 // pred_check_branch
        %257 = sbr.rel (%p255) target = $region40
      $region39: #{tpu_custom_call.1} parent=5 // pred_region
        // Predicated region
        $region41: #{tpu_custom_call.1} parent=39 // pred_check
          %p258 = pneg %p37
        $region42: #{tpu_custom_call.1} parent=39 // pred_check_branch
          %260 = sbr.rel (%p258) target = $region44
        $region43: #{tpu_custom_call.1} parent=39 // pred_region
          %p261 = scmp.lt.s32.totalorder %s17, 1
          %s262 = scalar_select %p261, %s17, 1
          %s263 = smul.addr %s262, 4
          %s264 = scalar_lea.vmem %s0, %s263
        $region44: #{tpu_custom_call.1} parent=39 // pred_fallthru
          _
        // Predicated region
        $region45: #{tpu_custom_call.1} parent=39 // pred_check
          %p265 = pneg %p63
        $region46: #{tpu_custom_call.1} parent=39 // pred_check_branch
          %267 = sbr.rel (%p265) target = $region48
        $region47: #{tpu_custom_call.1} parent=39 // pred_region
          %p268 = scmp.lt.s32.totalorder %s17, 1
          %s269 = scalar_select %p268, %s17, 1
          %s270 = smul.addr %s269, 4
          %s271 = scalar_lea.vmem %s1, %s270
        $region48: #{tpu_custom_call.1} parent=39 // pred_fallthru
          _
      $region40: #{tpu_custom_call.1} parent=5 // pred_fallthru
        _
      %p272 = scmp.le.s32.totalorder 1, %s17
      %p273 = scmp.lt.s32.totalorder %s17, 3
      %p274 = pnand %p272, %p273
      %p275 = pneg %p274
      // Predicated region
      $region49: #{tpu_custom_call.1} parent=5 // pred_check
        _
      $region50: #{tpu_custom_call.1} parent=5 // pred_check_branch
        %277 = sbr.rel (%p274) target = $region52
      $region51: #{tpu_custom_call.1} parent=5 // pred_region
        %s278 = ssub.s32 %s17, 1
        %p279 = scmp.lt.s32.totalorder %s22, 1
        %s280 = scalar_select %p279, %s22, 1
        %s281 = smul.addr %s280, 4
        %s282 = scalar_lea.vmem %s0, %s281
        %p283 = pneg %p43
        %p284 = pneg %p40
        %p285 = scmp.lt.s32.totalorder %s22, 1
        %s286 = scalar_select %p285, %s22, 1
        %s287 = smul.addr %s286, 4
        %s288 = scalar_lea.vmem %s1, %s287
        %p289 = pneg %p69
        %p290 = pneg %p66
        %p291 = pneg %p90
        %p292 = pneg %p87
        %p293 = pneg %p111
        %p294 = pneg %p108
        %p295 = pneg %p132
        %p296 = pneg %p129
        %p297 = pneg %p153
        %p298 = pneg %p150
        %p299 = pneg %p174
        %p300 = pneg %p171
        %p301 = pneg %p195
        %p302 = pneg %p192
        %p303 = pneg %p221
        %p304 = pneg %p218
        %s305 = sand.u32 %s208, 1
        %s306 = scalar_lea.sflag [#allocation3], %s305
        %s307 = sand.u32 %s208, 1
        %s308 = smul.addr %s307, 8
        %s309 = scalar_lea.vmem [#allocation2], %s308
        %p310 = scmp.lt.s32.totalorder %s22, 1
        %s311 = scalar_select %p310, %s22, 1
        %s312 = smul.addr %s311, 4
        %s313 = scalar_lea.vmem %s0, %s312
        %p314 = scmp.lt.s32.totalorder %s22, 1
        %s315 = scalar_select %p314, %s22, 1
        %s316 = smul.addr %s315, 4
        %s317 = scalar_lea.vmem %s1, %s316
        %v318 = vld [vmem:[%s313] sm:$0xf]
        %v319 = vld [vmem:[%s317] sm:$0xf]
        %v321 = vrot.slane %v319, 4
        %vm323 = vcmask 1043456
        %v324 = vsel %vm323, %v318, %v321
        %v325 = vld [vmem:[%s2] sm:$0xff]
        %327 = vrot.lane.b32.xlu0 %v324, 1
        %v328 = vpop.permute.xlu0 %327
        %vm330 = vcmask 7168
        %v331 = vsel %vm330, 0.0, %v328
        %332 = vrot.lane.b32.xlu0 %v324, 127
        %v333 = vpop.permute.xlu0 %332
        %vm335 = vcmask 121856
        %v336 = vsel %vm335, %v333, 0.0
        %vm337 = vcmask 195584
        %v339 = vsel %vm337, %v325, 0
        %341 = vmatprep.subr.mxu0 0.0
        %342 = vmatpush1.msra.mxu0 0.0
        %343 = vmatprep.subr.mxu0 0.0
        %344 = vmatpush1.msra.mxu0 0.0
        %345 = vmatprep.subr.mxu0 0.0
        %346 = vmatpush1.msra.mxu0 0.0
        %347 = vmatprep.subr.mxu0 0.0
        %348 = vmatpush1.msra.mxu0 0.0
        %349 = vmatprep.subr.mxu0 0.0
        %350 = vmatpush1.msra.mxu0 0.0
        %351 = vmatprep.subr.mxu0 0.0
        %352 = vmatpush1.msra.mxu0 0.0
        %353 = vmatprep.subr.mxu0 0.0
        %354 = vmatpush1.msra.mxu0 0.0
        %355 = vmatprep.subr.mxu0 0.0
        %356 = vmatpush1.msra.mxu0 0.0
        %357 = vmatprep.subr.mxu0 0.0
        %358 = vmatpush1.msra.mxu0 0.0
        %359 = vmatprep.subr.mxu0 0.0
        %360 = vmatpush1.msra.mxu0 0.0
        %361 = vmatprep.subr.mxu0 0.0
        %362 = vmatpush1.msra.mxu0 0.0
        %363 = vmatprep.subr.mxu0 0.0
        %364 = vmatpush1.msra.mxu0 0.0
        %365 = vmatprep.subr.mxu0 0.0
        %366 = vmatpush1.msra.mxu0 0.0
        %367 = vmatprep.subr.mxu0 0.0
        %368 = vmatpush1.msra.mxu0 %v336
        %369 = vmatprep.subr.mxu0 0.0
        %370 = vmatpush1.msra.mxu0 %v324
        %371 = vmatprep.subr.mxu0 0.0
        %372 = vmatpush1.msra.mxu0 %v331
        %373 = vmatprep.subr.mxu0 0.0
        %374 = vmatpush2.msra.mxu0 0.0
        %375 = vmatprep.subr.mxu0 0.0
        %376 = vmatpush2.msra.mxu0 0.0
        %377 = vmatprep.subr.mxu0 0.0
        %378 = vmatpush2.msra.mxu0 0.0
        %379 = vmatprep.subr.mxu0 0.0
        %380 = vmatpush2.msra.mxu0 0.0
        %381 = vmatprep.subr.mxu0 0.0
        %382 = vmatpush2.msra.mxu0 0.0
        %383 = vmatprep.subr.mxu0 0.0
        %384 = vmatpush2.msra.mxu0 0.0
        %385 = vmatprep.subr.mxu0 0.0
        %386 = vmatpush2.msra.mxu0 0.0
        %387 = vmatprep.subr.mxu0 0.0
        %388 = vmatpush2.msra.mxu0 0.0
        %389 = vmatprep.subr.mxu0 0.0
        %390 = vmatpush2.msra.mxu0 0.0
        %391 = vmatprep.subr.mxu0 0.0
        %392 = vmatpush2.msra.mxu0 0.0
        %393 = vmatprep.subr.mxu0 0.0
        %394 = vmatpush2.msra.mxu0 0.0
        %395 = vmatprep.subr.mxu0 0.0
        %396 = vmatpush2.msra.mxu0 0.0
        %397 = vmatprep.subr.mxu0 0.0
        %398 = vmatpush2.msra.mxu0 0.0
        %399 = vmatprep.subr.mxu0 0.0
        %400 = vmatpush2.msra.mxu0 0.0
        %401 = vmatprep.subr.mxu0 0.0
        %402 = vmatpush2.msra.mxu0 0.0
        %403 = vmatprep.subr.mxu0 0.0
        %404 = vmatpush2.msra.mxu0 0.0
        %405 = vmatprep.mubr.f32.mxu0 0.0
        %406 = vmatmul.mubr.f32.gmra.mxu0 %v339
        %v407 = vpop.f32.mrf.mxu0
        %v408 = vadd.f32 0.0, %v407
        %v409 = vpop.f32.mrf.mxu0
        %410 = vdwg.mxu0
        %v411 = vld [vmem:[%s3] sm:$0xff]
        %413 = vset.pattern.permute.xlu0 0
        %414 = vperm.xlu0 %413, %v411
        %v415 = vpop.permute.xlu0 %414
        %v417 = vmul.f32 %v408, %v415
        %v418 = vld [vmem:[%s4] sm:$0xff]
        %420 = vset.pattern.permute.xlu0 0
        %421 = vperm.xlu0 %420, %v418
        %v422 = vpop.permute.xlu0 %421
        %v424 = vadd.f32 %v417, %v422
        %v425 = vmax.f32 %v424, 0.0
        %v426 = vld [vmem:[%s5] sm:$0xff]
        %428 = vrot.lane.b32.xlu0 %v425, 1
        %v429 = vpop.permute.xlu0 %428
        %v431 = vsel %vm330, 0.0, %v429
        %432 = vrot.lane.b32.xlu0 %v425, 127
        %v433 = vpop.permute.xlu0 %432
        %v435 = vsel %vm335, %v433, 0.0
        %v437 = vsel %vm337, %v426, 0
        %439 = vmatprep.subr.mxu0 0.0
        %440 = vmatpush1.msra.mxu0 0.0
        %441 = vmatprep.subr.mxu0 0.0
        %442 = vmatpush1.msra.mxu0 0.0
        %443 = vmatprep.subr.mxu0 0.0
        %444 = vmatpush1.msra.mxu0 0.0
        %445 = vmatprep.subr.mxu0 0.0
        %446 = vmatpush1.msra.mxu0 0.0
        %447 = vmatprep.subr.mxu0 0.0
        %448 = vmatpush1.msra.mxu0 0.0
        %449 = vmatprep.subr.mxu0 0.0
        %450 = vmatpush1.msra.mxu0 0.0
        %451 = vmatprep.subr.mxu0 0.0
        %452 = vmatpush1.msra.mxu0 0.0
        %453 = vmatprep.subr.mxu0 0.0
        %454 = vmatpush1.msra.mxu0 0.0
        %455 = vmatprep.subr.mxu0 0.0
        %456 = vmatpush1.msra.mxu0 0.0
        %457 = vmatprep.subr.mxu0 0.0
        %458 = vmatpush1.msra.mxu0 0.0
        %459 = vmatprep.subr.mxu0 0.0
        %460 = vmatpush1.msra.mxu0 0.0
        %461 = vmatprep.subr.mxu0 0.0
        %462 = vmatpush1.msra.mxu0 0.0
        %463 = vmatprep.subr.mxu0 0.0
        %464 = vmatpush1.msra.mxu0 0.0
        %465 = vmatprep.subr.mxu0 0.0
        %466 = vmatpush1.msra.mxu0 %v435
        %467 = vmatprep.subr.mxu0 0.0
        %468 = vmatpush1.msra.mxu0 %v425
        %469 = vmatprep.subr.mxu0 0.0
        %470 = vmatpush1.msra.mxu0 %v431
        %471 = vmatprep.subr.mxu0 0.0
        %472 = vmatpush2.msra.mxu0 0.0
        %473 = vmatprep.subr.mxu0 0.0
        %474 = vmatpush2.msra.mxu0 0.0
        %475 = vmatprep.subr.mxu0 0.0
        %476 = vmatpush2.msra.mxu0 0.0
        %477 = vmatprep.subr.mxu0 0.0
        %478 = vmatpush2.msra.mxu0 0.0
        %479 = vmatprep.subr.mxu0 0.0
        %480 = vmatpush2.msra.mxu0 0.0
        %481 = vmatprep.subr.mxu0 0.0
        %482 = vmatpush2.msra.mxu0 0.0
        %483 = vmatprep.subr.mxu0 0.0
        %484 = vmatpush2.msra.mxu0 0.0
        %485 = vmatprep.subr.mxu0 0.0
        %486 = vmatpush2.msra.mxu0 0.0
        %487 = vmatprep.subr.mxu0 0.0
        %488 = vmatpush2.msra.mxu0 0.0
        %489 = vmatprep.subr.mxu0 0.0
        %490 = vmatpush2.msra.mxu0 0.0
        %491 = vmatprep.subr.mxu0 0.0
        %492 = vmatpush2.msra.mxu0 0.0
        %493 = vmatprep.subr.mxu0 0.0
        %494 = vmatpush2.msra.mxu0 0.0
        %495 = vmatprep.subr.mxu0 0.0
        %496 = vmatpush2.msra.mxu0 0.0
        %497 = vmatprep.subr.mxu0 0.0
        %498 = vmatpush2.msra.mxu0 0.0
        %499 = vmatprep.subr.mxu0 0.0
        %500 = vmatpush2.msra.mxu0 0.0
        %501 = vmatprep.subr.mxu0 0.0
        %502 = vmatpush2.msra.mxu0 0.0
        %503 = vmatprep.mubr.f32.mxu0 0.0
        %504 = vmatmul.mubr.f32.gmra.mxu0 %v437
        %v505 = vpop.f32.mrf.mxu0
        %v506 = vadd.f32 0.0, %v505
        %v507 = vpop.f32.mrf.mxu0
        %508 = vdwg.mxu0
        %v509 = vld [vmem:[%s6] sm:$0xff]
        %511 = vset.pattern.permute.xlu0 0
        %512 = vperm.xlu0 %511, %v509
        %v513 = vpop.permute.xlu0 %512
        %v515 = vmul.f32 %v506, %v513
        %v516 = vld [vmem:[%s7] sm:$0xff]
        %518 = vset.pattern.permute.xlu0 0
        %519 = vperm.xlu0 %518, %v516
        %v520 = vpop.permute.xlu0 %519
        %v522 = vadd.f32 %v515, %v520
        %v523 = vmax.f32 %v522, 0.0
        %vm524 = vcmask 130048
        %525 = vst.msk [vmem:[%s309] sm:$0xff] %vm524, %v523
        %s526 = sand.u32 %s208, 1
        %s527 = scalar_lea.sflag [#allocation3], %s526
        %s528 = sand.u32 %s208, 1
        %s529 = smul.addr %s528, 8
        %s530 = scalar_lea.vmem [#allocation2], %s529
        // Predicated region
        $region53: #{tpu_custom_call.1} parent=51 // pred_check
          %p531 = pneg %p218
        $region54: #{tpu_custom_call.1} parent=51 // pred_check_branch
          %533 = sbr.rel (%p531) target = $region56
        $region55: #{tpu_custom_call.1} parent=51 // pred_region
          %s535 = ssub.s32 128, 128
          %536 = vsyncadd %s527, %s535
          %s537 = smul.addr %s22, 128
          %s538 = scalar_lea.hbm %s8, %s537
          %s540 = sshll.u32 %s530, 4
          %s541 = int_to_ptr.vmem [resolvable:$true] %s540
          %543 = dma.vmem_to_hbm [thread:$0]  %s541, 128, %s538, %s527
        $region56: #{tpu_custom_call.1} parent=51 // pred_fallthru
          _
      $region52: #{tpu_custom_call.1} parent=5 // pred_fallthru
        _
      %p544 = scmp.le.s32.totalorder 2, %s17
      // Predicated region
      $region57: #{tpu_custom_call.1} parent=5 // pred_check
        %p545 = pneg %p544
      $region58: #{tpu_custom_call.1} parent=5 // pred_check_branch
        %547 = sbr.rel (%p545) target = $region60
      $region59: #{tpu_custom_call.1} parent=5 // pred_region
        %s548 = ssub.s32 %s17, 2
        // Predicated region
        $region61: #{tpu_custom_call.1} parent=59 // pred_check
          %p549 = pneg %p224
        $region62: #{tpu_custom_call.1} parent=59 // pred_check_branch
          %551 = sbr.rel (%p549) target = $region64
        $region63: #{tpu_custom_call.1} parent=59 // pred_region
          %s552 = sand.u32 %s209, 1
          %s553 = scalar_lea.sflag [#allocation3], %s552
          %s554 = sand.u32 %s209, 1
          %s555 = smul.addr %s554, 8
          %s556 = scalar_lea.vmem [#allocation2], %s555
          %557 = dma.done %s553, 128
        $region64: #{tpu_custom_call.1} parent=59 // pred_fallthru
          _
      $region60: #{tpu_custom_call.1} parent=5 // pred_fallthru
        _
    $region6: #{tpu_custom_call.1} parent=1 // loop_footer
      %s21 = sadd.s32 1, %s17
    $region7: #{tpu_custom_call.1} parent=1 // loop_footer_branch
      %16 = sbr.rel target = $region3
    $region8: #{tpu_custom_call.1} parent=1 // loop_exit
      _
    %558 = vsyncpa [#allocation3], 1
    %s559 = scalar_lea.sflag [#allocation3], 1
    %560 = vsyncpa %s559, 1

</llo_original>
